<compile_context>
chip_gen: v7x
topology: tpu7x:2x2x1
jax: 0.10.0
libtpu: 0.0.40
codegen_flags: <defaults>
</compile_context>

<pallas_src>
import functools

import jax
import jax.numpy as jnp
from jax.experimental import pallas as pl
from jax.experimental.pallas import tpu as pltpu

_LEAKY_SLOPE = 0.01  # nn.LeakyReLU default negative_slope


# ---------------------------------------------------------------------------
# One-time, generation-aware hardware queries (safe fallbacks if unavailable).
# ---------------------------------------------------------------------------
def _query_tpu():
    vmem_cap = 64 * 1024 * 1024   # conservative default (v7x per-TC VMEM)
    num_cores = 1
    try:
        info = pltpu.get_tpu_info()
        vmem_cap = int(getattr(info, "vmem_capacity_bytes", vmem_cap))
        for name in ("num_cores", "num_tensorcores", "core_count",
                     "tensorcore_count", "num_cores_per_chip"):
            v = getattr(info, name, None)
            if isinstance(v, int) and v > 0:
                num_cores = v
                break
    except Exception:
        pass
    return vmem_cap, num_cores


_VMEM_CAP_BYTES, _NUM_TENSORCORES = _query_tpu()


def _round_up(a, b):
    return ((a + b - 1) // b) * b


def _linear_leakyrelu_kernel(x_ref, wt_ref, b_ref, o_ref):
    # x_ref : (tm, d_in)   VMEM batch tile
    # wt_ref: (d_in, tn)   VMEM weight tile, already in matmul-native layout
    #                      -> plain MXU matmul, no per-step transpose/relayout
    # b_ref : (1, tn)      VMEM bias tile
    # o_ref : (tm, tn)     VMEM output tile
    y = jnp.dot(x_ref[...], wt_ref[...], preferred_element_type=jnp.float32)
    y = y + b_ref[...].astype(jnp.float32)
    y = jnp.maximum(y, jnp.float32(_LEAKY_SLOPE) * y)  # LeakyReLU, one VPU max
    o_ref[...] = y.astype(o_ref.dtype)


@functools.partial(jax.jit, static_argnames=("block_m", "block_n"))
def simple_reg_emb(x, weight, bias, *, block_m=256, block_n=2048):
    """Forward of SimpleRegEmb: LeakyReLU(x @ weight.T + bias).

    x: (B, d_in); weight: (d_out, d_in) (PyTorch nn.Linear layout); bias: (d_out,)
    """
    B, d_in = x.shape
    d_out = weight.shape[0]
    itemsize = jnp.dtype(x.dtype).itemsize

    # dtype-dependent sublane granularity: 8 rows (f32), 16 (bf16), 32 (int8).
    sub = 8 * max(1, 4 // max(1, itemsize))

    # ---- conditional lane padding of d_out --------------------------------
    # Pad to a multiple of 128 lanes only when overhead <= 12.5%; otherwise
    # keep the native width (masked stores) to avoid inflating HBM traffic.
    if d_out % 128 == 0:
        d_out_p = d_out
    else:
        cand = _round_up(d_out, 128)
        d_out_p = cand if (d_out >= 128 and 8 * cand <= 9 * d_out) else d_out

    # ---- weight in matmul-native layout (one-time wrapper transpose) ------
    wt = weight.T                                     # (d_in, d_out)
    if d_out_p != d_out:
        wt = jnp.pad(wt, ((0, 0), (0, d_out_p - d_out)))
        b2 = jnp.pad(bias, (0, d_out_p - d_out)).reshape(1, d_out_p)
    else:
        b2 = bias.reshape(1, d_out_p)

    # ---- batch (M) tiling: no wrapper pad; ragged last tile handled by the
    # ---- pipeline (OOB reads unspecified, OOB writes dropped) -------------
    if B <= sub:
        tm = B                                        # single full-dim block
    else:
        tm = min(block_m, (B // sub) * sub)
        if _NUM_TENSORCORES > 1 and B >= _NUM_TENSORCORES * sub:
            # Megacore (v7x): balanced tiles so both TensorCores get work.
            per_core = _round_up(pl.cdiv(B, _NUM_TENSORCORES), sub)
            tm = min(tm, per_core)
        tm = max(sub, (tm // sub) * sub)
    grid_m = pl.cdiv(B, tm)

    # ---- d_out (N) tiling: only when d_out is large and 128-aligned -------
    if d_out_p % 128 == 0 and d_out_p > block_n:
        tn = block_n
    else:
        tn = d_out_p
    grid_n = pl.cdiv(d_out_p, tn)

    # ---- VMEM budget (double-buffered tiles + f32 intermediate) -----------
    vmem_est = (2 * tm * d_in * itemsize        # x tiles
                + 2 * d_in * tn * itemsize      # weight tiles
                + 2 * tn * itemsize             # bias tiles
                + 2 * tm * tn * itemsize        # output tiles
                + tm * tn * 4)                  # f32 matmul result / epilogue
    vmem_cap = min(_VMEM_CAP_BYTES, 100 * 1024 * 1024)
    vmem_limit = int(min(vmem_cap, max(16 * 1024 * 1024, 4 * vmem_est)))

    cost = pl.CostEstimate(
        flops=2 * B * d_in * d_out_p + 2 * B * d_out_p,
        transcendentals=0,
        bytes_accessed=(B * d_in + d_in * d_out_p + d_out_p + B * d_out_p)
        * itemsize,
    )

    out = pl.pallas_call(
        _linear_leakyrelu_kernel,
        out_shape=jax.ShapeDtypeStruct((B, d_out_p), x.dtype),
        grid=(grid_m, grid_n),
        in_specs=[
            pl.BlockSpec((tm, d_in), lambda i, j: (i, 0)),   # x batch tile
            pl.BlockSpec((d_in, tn), lambda i, j: (0, j)),   # W tile (resident if grid_n==1)
            pl.BlockSpec((1, tn), lambda i, j: (0, j)),      # bias tile
        ],
        out_specs=pl.BlockSpec((tm, tn), lambda i, j: (i, j)),
        compiler_params=pltpu.CompilerParams(
            dimension_semantics=("parallel", "parallel"),
            vmem_limit_bytes=vmem_limit,
        ),
        cost_estimate=cost,
    )(x, wt, b2)

    # Only a lane slice when d_out was padded; no batch pad/slice at all.
    return out if d_out_p == d_out else out[:, :d_out]


if __name__ == "__main__":
    # Small shapes consistent with the module: batch=8, d_in=32, d_out=32
    B, d_in, d_out = 8, 32, 32

    key = jax.random.PRNGKey(0)
    kx, kw, kb = jax.random.split(key, 3)

    x = jax.random.normal(kx, (B, d_in), dtype=jnp.float32)
    # Deterministic "nn.Linear"-style init (uniform in +/- 1/sqrt(d_in))
    bound = 1.0 / (d_in ** 0.5)
    weight = jax.random.uniform(kw, (d_out, d_in), jnp.float32, -bound, bound)
    bias = jax.random.uniform(kb, (d_out,), jnp.float32, -bound, bound)

    out = simple_reg_emb(x, weight, bias)
    jax.block_until_ready(out)

    # Reference check in plain JAX
    ref = x @ weight.T + bias
    ref = jnp.where(ref > 0, ref, _LEAKY_SLOPE * ref)
    assert out.shape == (B, d_out)
    assert jnp.allclose(out, ref, atol=1e-4, rtol=1e-4)

    # Exercise the multi-tile / ragged-last-tile path (no wrapper pad/slice).
    B2 = 300
    x2 = jax.random.normal(jax.random.PRNGKey(1), (B2, d_in), dtype=jnp.float32)
    out2 = simple_reg_emb(x2, weight, bias, block_m=128)
    jax.block_until_ready(out2)
    ref2 = x2 @ weight.T + bias
    ref2 = jnp.where(ref2 > 0, ref2, _LEAKY_SLOPE * ref2)
    assert out2.shape == (B2, d_out)
    assert jnp.allclose(out2, ref2, atol=1e-4, rtol=1e-4)

    print("KERNEL_OK")
</pallas_src>

<mosaic_0001>
module attributes {stable_mosaic.version = 11 : i64} {
  func.func @_linear_leakyrelu_kernel(%arg0: i32, %arg1: i32, %arg2: memref<8x32xf32, #tpu.memory_space<vmem>>, %arg3: memref<32x32xf32, #tpu.memory_space<vmem>>, %arg4: memref<1x32xf32, #tpu.memory_space<vmem>>, %arg5: memref<8x32xf32, #tpu.memory_space<vmem>>) attributes {dimension_semantics = [#tpu.dimension_semantics<parallel>, #tpu.dimension_semantics<parallel>], iteration_bounds = array<i64: 1, 1>, scalar_prefetch = 0 : i64, scratch_operands = 0 : i64, tpu.core_type = #tpu.core_type<tc>, window_params = [{transform_indices = @transform_0, window_bounds = array<i64: 8, 32>}, {transform_indices = @transform_1, window_bounds = array<i64: 32, 32>}, {transform_indices = @transform_2, window_bounds = array<i64: 1, 32>}, {transform_indices = @transform_3, window_bounds = array<i64: 8, 32>}]} {
    %c0 = arith.constant 0 : index
    %c0_0 = arith.constant 0 : index
    %0 = vector.load %arg2[%c0, %c0_0] : memref<8x32xf32, #tpu.memory_space<vmem>>, vector<8x32xf32>
    %c0_1 = arith.constant 0 : index
    %c0_2 = arith.constant 0 : index
    %1 = vector.load %arg3[%c0_1, %c0_2] : memref<32x32xf32, #tpu.memory_space<vmem>>, vector<32x32xf32>
    %cst = arith.constant dense<0.000000e+00> : vector<8x32xf32>
    %2 = tpu.matmul %0, %1, %cst {dimension_numbers = #tpu.dot_dimension_numbers<[1], [0], [0], [1], [0, 0, 1, 1], [], []>} : vector<8x32xf32>, vector<32x32xf32>, vector<8x32xf32> -> vector<8x32xf32>
    %c0_3 = arith.constant 0 : index
    %c0_4 = arith.constant 0 : index
    %3 = vector.load %arg4[%c0_3, %c0_4] : memref<1x32xf32, #tpu.memory_space<vmem>>, vector<1x32xf32>
    %4 = vector.broadcast %3 : vector<1x32xf32> to vector<8x32xf32>
    %5 = arith.addf %2, %4 : vector<8x32xf32>
    %cst_5 = arith.constant 0.00999999977 : f32
    %6 = vector.broadcast %cst_5 : f32 to vector<8x32xf32>
    %7 = arith.mulf %6, %5 : vector<8x32xf32>
    %8 = arith.maximumf %5, %7 : vector<8x32xf32>
    %c0_6 = arith.constant 0 : index
    %c0_7 = arith.constant 0 : index
    %9 = vector.load %arg5[%c0_6, %c0_7] : memref<8x32xf32, #tpu.memory_space<vmem>>, vector<8x32xf32>
    tpu.vector_store %arg5[%c0_6, %c0_7], %8 {strides = array<i32>} : memref<8x32xf32, #tpu.memory_space<vmem>>, vector<8x32xf32>,
    return
  }
  func.func @transform_0(%arg0: i32, %arg1: i32) -> (i32, i32) {
    %c0_i32 = arith.constant 0 : i32
    %c0_i32_0 = arith.constant 0 : i32
    return %arg0, %c0_i32 : i32, i32
  }
  func.func @transform_1(%arg0: i32, %arg1: i32) -> (i32, i32) {
    %c0_i32 = arith.constant 0 : i32
    %c0_i32_0 = arith.constant 0 : i32
    return %c0_i32, %arg1 : i32, i32
  }
  func.func @transform_2(%arg0: i32, %arg1: i32) -> (i32, i32) {
    %c0_i32 = arith.constant 0 : i32
    %c0_i32_0 = arith.constant 0 : i32
    return %c0_i32, %arg1 : i32, i32
  }
  func.func @transform_3(%arg0: i32, %arg1: i32) -> (i32, i32) {
    %c0_i32 = arith.constant 0 : i32
    return %arg0, %arg1 : i32, i32
  }
}

</mosaic_0001>

<llo_original>
// kernel: simple_reg_emb.1
$region0: #{simple_reg_emb.1}
  #allocation0 [shape = 'u32[]', space=smem, size = 0x4, offset = 0x4, fixed_abs, tag = 'smem constant byte address 0x4 - core index']
  #allocation1 [shape = 'u32[144,128]{1,0:T(1,128)}', space=vmem, size = 0x12000, scoped, tag = 'internal scratch']
  %s0 = inlined_call_operand.vmem [shape: f32[8,32], index: 0, kind: input, shape index: {}]
  %s1 = inlined_call_operand.vmem [shape: f32[32,32], index: 1, kind: input, shape index: {}]
  %s2 = inlined_call_operand.vmem [shape: f32[1,32], index: 2, kind: input, shape index: {}]
  %s3 = inlined_call_operand.hbm [shape: f32[8,32], index: 3, kind: output, shape index: {}]
  %s4 = sld [smem:[#allocation0]]
  $region22: #{simple_reg_emb.1} parent=0
    _
  %s6 = ssub.s32 1, %s4
  %s7 = scalar_select 0, %s6, %s4
  $region1: #{simple_reg_emb.1} parent=0
    #allocation2 [shape = 'u8[4096]{0}', space=vmem, size = 0x1000, scoped, tag = 'output window, operand 0, single buffered']
    #allocation3 [shape = 's32[1]{0}', space=sflag, size = 0x4, scoped, tag = 'scoped memory for simple_reg_emb.1']
    %8 = vsyncpa [#allocation3], 0
    // Predicated region
    $region2: #{simple_reg_emb.1} parent=1 // pred_check
      _
    $region3: #{simple_reg_emb.1} parent=1 // pred_check_branch
      %10 = sbr.rel (0) target = $region5
    $region4: #{simple_reg_emb.1} parent=1 // pred_region
      _
    $region5: #{simple_reg_emb.1} parent=1 // pred_fallthru
      _
    // Predicated region
    $region6: #{simple_reg_emb.1} parent=1 // pred_check
      _
    $region7: #{simple_reg_emb.1} parent=1 // pred_check_branch
      %12 = sbr.rel (0) target = $region9
    $region8: #{simple_reg_emb.1} parent=1 // pred_region
      _
    $region9: #{simple_reg_emb.1} parent=1 // pred_fallthru
      _
    // Predicated region
    $region10: #{simple_reg_emb.1} parent=1 // pred_check
      _
    $region11: #{simple_reg_emb.1} parent=1 // pred_check_branch
      %14 = sbr.rel (0) target = $region13
    $region12: #{simple_reg_emb.1} parent=1 // pred_region
      _
    $region13: #{simple_reg_emb.1} parent=1 // pred_fallthru
      _
    %v15 = vld [vmem:[%s0] sm:$0xff]
    %v16 = vld [vmem:[%s1] sm:$0xff]
    %v17 = vld [vmem:[%s1 + $0x8] sm:$0xff]
    %v18 = vld [vmem:[%s1 + $0x10] sm:$0xff]
    %v19 = vld [vmem:[%s1 + $0x18] sm:$0xff]
    %v20 = vld [vmem:[%s2] sm:$0x1]
    %v22 = vlaneseq
    %v23 = vshrl.u32 %v22, 7
    %v24 = vsub.s32 0, %v23
    %v25 = vrot.slane %v20, %v24
    %vm27 = vcmask 261120
    %v29 = vsel %vm27, %v15, 0
    %31 = vmatprep.subr.mxu0 0.0
    %32 = vmatpush1.msra.mxu0 %v16
    %33 = vmatprep.subr.mxu0 0.0
    %34 = vmatpush1.msra.mxu0 %v17
    %35 = vmatprep.subr.mxu0 0.0
    %36 = vmatpush1.msra.mxu0 %v18
    %37 = vmatprep.subr.mxu0 0.0
    %38 = vmatpush1.msra.mxu0 %v19
    %39 = vmatprep.subr.mxu0 0.0
    %40 = vmatpush1.msra.mxu0 0.0
    %41 = vmatprep.subr.mxu0 0.0
    %42 = vmatpush1.msra.mxu0 0.0
    %43 = vmatprep.subr.mxu0 0.0
    %44 = vmatpush1.msra.mxu0 0.0
    %45 = vmatprep.subr.mxu0 0.0
    %46 = vmatpush1.msra.mxu0 0.0
    %47 = vmatprep.subr.mxu0 0.0
    %48 = vmatpush1.msra.mxu0 0.0
    %49 = vmatprep.subr.mxu0 0.0
    %50 = vmatpush1.msra.mxu0 0.0
    %51 = vmatprep.subr.mxu0 0.0
    %52 = vmatpush1.msra.mxu0 0.0
    %53 = vmatprep.subr.mxu0 0.0
    %54 = vmatpush1.msra.mxu0 0.0
    %55 = vmatprep.subr.mxu0 0.0
    %56 = vmatpush1.msra.mxu0 0.0
    %57 = vmatprep.subr.mxu0 0.0
    %58 = vmatpush1.msra.mxu0 0.0
    %59 = vmatprep.subr.mxu0 0.0
    %60 = vmatpush1.msra.mxu0 0.0
    %61 = vmatprep.subr.mxu0 0.0
    %62 = vmatpush1.msra.mxu0 0.0
    %63 = vmatprep.subr.mxu0 0.0
    %64 = vmatpush1.msra.mxu0 0.0
    %65 = vmatprep.subr.mxu0 0.0
    %66 = vmatpush1.msra.mxu0 0.0
    %67 = vmatprep.subr.mxu0 0.0
    %68 = vmatpush1.msra.mxu0 0.0
    %69 = vmatprep.subr.mxu0 0.0
    %70 = vmatpush1.msra.mxu0 0.0
    %71 = vmatprep.subr.mxu0 0.0
    %72 = vmatpush1.msra.mxu0 0.0
    %73 = vmatprep.subr.mxu0 0.0
    %74 = vmatpush1.msra.mxu0 0.0
    %75 = vmatprep.subr.mxu0 0.0
    %76 = vmatpush1.msra.mxu0 0.0
    %77 = vmatprep.subr.mxu0 0.0
    %78 = vmatpush1.msra.mxu0 0.0
    %79 = vmatprep.subr.mxu0 0.0
    %80 = vmatpush1.msra.mxu0 0.0
    %81 = vmatprep.subr.mxu0 0.0
    %82 = vmatpush1.msra.mxu0 0.0
    %83 = vmatprep.subr.mxu0 0.0
    %84 = vmatpush1.msra.mxu0 0.0
    %85 = vmatprep.subr.mxu0 0.0
    %86 = vmatpush1.msra.mxu0 0.0
    %87 = vmatprep.subr.mxu0 0.0
    %88 = vmatpush1.msra.mxu0 0.0
    %89 = vmatprep.subr.mxu0 0.0
    %90 = vmatpush1.msra.mxu0 0.0
    %91 = vmatprep.subr.mxu0 0.0
    %92 = vmatpush1.msra.mxu0 0.0
    %93 = vmatprep.subr.mxu0 0.0
    %94 = vmatpush1.msra.mxu0 0.0
    %95 = vmatprep.mubr.f32.mxu0 0.0
    %96 = vmatmul.mubr.f32.gmra.mrb[0].mxu0 %v29
    %v97 = vpop.f32.mrb[0].mxu0
    %v98 = vadd.f32 %v25, %v97
    %v99 = vpop.f32.mrb[0].mxu0
    %100 = vdwg.mxu0
    %v101 = vmul.f32 %v98, 0.01
    %v102 = vmax.f32 %v98, %v101
    %103 = vst.msk [vmem:[#allocation2] sm:$0xff] %vm27, %v102
    // Predicated region
    $region14: #{simple_reg_emb.1} parent=1 // pred_check
      _
    $region15: #{simple_reg_emb.1} parent=1 // pred_check_branch
      %105 = sbr.rel (0) target = $region17
    $region16: #{simple_reg_emb.1} parent=1 // pred_region
      %s107 = ssub.s32 128, 128
      %108 = vsyncadd [#allocation3], %s107
      %s110 = sshll.u32 [#allocation2], 4
      %s111 = int_to_ptr.vmem [resolvable:$true] %s110
      %113 = dma.vmem_to_hbm [thread:$0]  %s111, 128, %s3, [#allocation3]
    $region17: #{simple_reg_emb.1} parent=1 // pred_fallthru
      _
    // Predicated region
    $region18: #{simple_reg_emb.1} parent=1 // pred_check
      _
    $region19: #{simple_reg_emb.1} parent=1 // pred_check_branch
      %115 = sbr.rel (0) target = $region21
    $region20: #{simple_reg_emb.1} parent=1 // pred_region
      %116 = dma.done [#allocation3], 128
    $region21: #{simple_reg_emb.1} parent=1 // pred_fallthru
      _
    %117 = vsyncpa [#allocation3], 1

</llo_original>
